<compile_context>
chip_gen: v5e
topology: v5e:2x2
jax: 0.10.0
libtpu: 0.0.40
codegen_flags: <defaults>
</compile_context>

<pallas_src>
import functools

import jax
import jax.numpy as jnp
from jax.experimental import pallas as pl
from jax.experimental.pallas import tpu as pltpu

# Fixed module constants from ProdNN.__init__ (requires_grad=False scalars).
A1, B1, F1 = 1.0, 20.0, -10.0
A2, B2, F2 = 0.5, -30.0, 20.0
DELTA = 10.0


def prodnn_kernel(x_ref, o_ref):
    # Exact algebraic fold of relu(x+20)*(-10) + relu(0.5x-30)*20 + 10 -> relu:
    #   = relu(relu(10x - 600) - relu(10x + 200) + 10)
    t = x_ref[...] * 10.0
    o_ref[...] = jnp.maximum(
        jnp.maximum(t - 600.0, 0.0) - jnp.maximum(t + 200.0, 0.0) + 10.0, 0.0
    )


def _prodnn_jnp(x):
    # Tiny-tail / fallback path (pure jnp, original module op order).
    r1 = jnp.maximum(x * A1 + B1, 0.0) * F1
    r2 = jnp.maximum(x * A2 + B2, 0.0) * F2
    return jnp.maximum(r1 + r2 + DELTA, 0.0)


@functools.lru_cache(maxsize=1)
def _chip_config():
    """Returns (target_block_bytes, vmem_limit_bytes_or_None, parallel_tensorcores)."""
    try:
        kind = jax.devices()[0].device_kind.lower()
    except Exception:
        kind = ""
    if "v7" in kind:
        # 6 MiB blocks (24 MiB double-buffered in+out); raise scoped VMEM for headroom.
        return 6 * 1024 * 1024, 48 * 1024 * 1024, 2
    if "v6" in kind:
        # 4 MiB blocks; 16 MiB double-buffered fits the 32 MiB default scoped VMEM.
        return 4 * 1024 * 1024, None, 1
    # v5e / unknown: 2 MiB blocks stay well under the 16 MiB default scoped VMEM.
    return 2 * 1024 * 1024, None, 1


def _round_up(x, m):
    return ((x + m - 1) // m) * m


def _pick_block_rows(rows, lane, target_block_bytes, n_cores):
    # Keep block *bytes* constant regardless of lane width.
    target = max(8, (target_block_bytes // 4) // lane)
    target -= target % 8
    if rows > target:
        return target
    if n_cores >= 2 and rows >= 16:
        # Force >=2 grid tiles so the "parallel" axis lands on both TensorCores.
        return min(_round_up(pl.cdiv(rows, 2), 8), rows)
    return rows  # single full-extent block (always a legal block shape)


def _run_kernel(x2d):
    rows, lane = x2d.shape
    target_block_bytes, vmem_limit, n_cores = _chip_config()
    block_rows = _pick_block_rows(rows, lane, target_block_bytes, n_cores)
    grid = (pl.cdiv(rows, block_rows),)
    n_elems = rows * lane

    cparams = {"dimension_semantics": ("parallel",)}
    if vmem_limit is not None:
        cparams["vmem_limit_bytes"] = vmem_limit

    return pl.pallas_call(
        prodnn_kernel,
        out_shape=jax.ShapeDtypeStruct((rows, lane), x2d.dtype),
        grid_spec=pltpu.PrefetchScalarGridSpec(
            num_scalar_prefetch=0,
            grid=grid,
            in_specs=[pl.BlockSpec((block_rows, lane), lambda i: (i, 0))],
            out_specs=pl.BlockSpec((block_rows, lane), lambda i: (i, 0)),
        ),
        compiler_params=pltpu.CompilerParams(**cparams),
        cost_estimate=pl.CostEstimate(
            flops=8 * n_elems, transcendentals=0, bytes_accessed=8 * n_elems
        ),
    )(x2d)


def prodnn_forward(x):
    """ProdNN forward: elementwise on any-shape float32 array (e.g. NCHW)."""
    orig_shape = x.shape
    n = x.size
    if n == 0:
        return x
    x_flat = x.reshape(-1)

    # Widest lane-dense width that divides n (keeps stores unmasked & wide).
    lane = next((c for c in (1024, 512, 256, 128) if n % c == 0), None)

    if lane is not None:
        rows = n // lane
        out2d = _run_kernel(x_flat.reshape(rows, lane))  # free reshape, no pad
        return out2d.reshape(orig_shape)

    # Ragged size: kernel on the aligned prefix, tiny jnp epilogue for the
    # (<1024-element) tail.  Avoids full-array pad + output-slice HBM passes.
    lane = 1024
    n_main = (n // lane) * lane
    if n_main == 0:
        return _prodnn_jnp(x_flat).reshape(orig_shape)
    head = _run_kernel(x_flat[:n_main].reshape(n_main // lane, lane)).reshape(-1)
    tail = _prodnn_jnp(x_flat[n_main:])
    return jnp.concatenate([head, tail]).reshape(orig_shape)


def prodnn_ref(x):
    # Reference follows the PyTorch module's exact op order.
    r1 = jnp.maximum(x * A1 + B1, 0.0) * F1
    r2 = jnp.maximum(x * A2 + B2, 0.0) * F2
    return jnp.maximum(r1 + r2 + DELTA, 0.0)


if __name__ == "__main__":
    key = jax.random.PRNGKey(0)
    # Small NCHW input consistent with the module's elementwise forward.
    x = jax.random.normal(key, (2, 4, 16, 16), dtype=jnp.float32) * 50.0

    out = jax.block_until_ready(prodnn_forward(x))
    ref = prodnn_ref(x)

    assert out.shape == x.shape
    # Kernel uses an algebraically exact fold of the constants; allow f32
    # rounding slack vs the module's op order (bounded by ~eps * |10x| near the
    # ReLU kinks, i.e. a few e-5 for this input scale).
    assert jnp.allclose(out, ref, rtol=1e-5, atol=2e-4), "mismatch vs reference"
    print("KERNEL_OK")
</pallas_src>

<mosaic_0001>
module attributes {stable_mosaic.version = 11 : i64} {
  func.func @prodnn_kernel(%arg0: i32, %arg1: memref<2x1024xf32, #tpu.memory_space<vmem>>, %arg2: memref<2x1024xf32, #tpu.memory_space<vmem>>) attributes {dimension_semantics = [#tpu.dimension_semantics<parallel>], iteration_bounds = array<i64: 1>, scalar_prefetch = 0 : i64, scratch_operands = 0 : i64, tpu.core_type = #tpu.core_type<tc>, window_params = [{transform_indices = @transform_0, window_bounds = array<i64: 2, 1024>}, {transform_indices = @transform_1, window_bounds = array<i64: 2, 1024>}]} {
    %c0 = arith.constant 0 : index
    %c0_0 = arith.constant 0 : index
    %0 = vector.load %arg1[%c0, %c0_0] : memref<2x1024xf32, #tpu.memory_space<vmem>>, vector<2x1024xf32>
    %cst = arith.constant 1.000000e+01 : f32
    %1 = vector.broadcast %cst : f32 to vector<2x1024xf32>
    %2 = arith.mulf %0, %1 : vector<2x1024xf32>
    %cst_1 = arith.constant 6.000000e+02 : f32
    %3 = vector.broadcast %cst_1 : f32 to vector<2x1024xf32>
    %4 = arith.subf %2, %3 : vector<2x1024xf32>
    %cst_2 = arith.constant 0.000000e+00 : f32
    %5 = vector.broadcast %cst_2 : f32 to vector<2x1024xf32>
    %6 = arith.maximumf %4, %5 : vector<2x1024xf32>
    %cst_3 = arith.constant 2.000000e+02 : f32
    %7 = vector.broadcast %cst_3 : f32 to vector<2x1024xf32>
    %8 = arith.addf %2, %7 : vector<2x1024xf32>
    %cst_4 = arith.constant 0.000000e+00 : f32
    %9 = vector.broadcast %cst_4 : f32 to vector<2x1024xf32>
    %10 = arith.maximumf %8, %9 : vector<2x1024xf32>
    %11 = arith.subf %6, %10 : vector<2x1024xf32>
    %cst_5 = arith.constant 1.000000e+01 : f32
    %12 = vector.broadcast %cst_5 : f32 to vector<2x1024xf32>
    %13 = arith.addf %11, %12 : vector<2x1024xf32>
    %cst_6 = arith.constant 0.000000e+00 : f32
    %14 = vector.broadcast %cst_6 : f32 to vector<2x1024xf32>
    %15 = arith.maximumf %13, %14 : vector<2x1024xf32>
    %c0_7 = arith.constant 0 : index
    %c0_8 = arith.constant 0 : index
    %16 = vector.load %arg2[%c0_7, %c0_8] : memref<2x1024xf32, #tpu.memory_space<vmem>>, vector<2x1024xf32>
    tpu.vector_store %arg2[%c0_7, %c0_8], %15 {strides = array<i32>} : memref<2x1024xf32, #tpu.memory_space<vmem>>, vector<2x1024xf32>,
    return
  }
  func.func @transform_0(%arg0: i32) -> (i32, i32) {
    %c0_i32 = arith.constant 0 : i32
    %c0_i32_0 = arith.constant 0 : i32
    return %arg0, %c0_i32 : i32, i32
  }
  func.func @transform_1(%arg0: i32) -> (i32, i32) {
    %c0_i32 = arith.constant 0 : i32
    %c0_i32_0 = arith.constant 0 : i32
    return %arg0, %c0_i32 : i32, i32
  }
}

</mosaic_0001>

<llo_original>
// kernel: tpu_custom_call.1
$region0: #{tpu_custom_call.1}
  #allocation0 [shape = 'u32[]', space=smem, size = 0x4, offset = 0x4, fixed_abs, tag = 'smem constant byte address 0x4 - core index']
  #allocation1 [shape = 'u32[72,128]{1,0:T(1,128)}', space=vmem, size = 0x9000, scoped, tag = 'internal scratch']
  %s0 = inlined_call_operand.hbm [shape: f32[2,1024], index: 0, kind: input, shape index: {}]
  %s1 = inlined_call_operand.hbm [shape: f32[2,1024], index: 1, kind: output, shape index: {}]
  %s2 = sld [smem:[#allocation0]]
  $region18: #{tpu_custom_call.1} parent=0
    _
  %s4 = ssub.s32 1, %s2
  %s5 = scalar_select 0, %s4, %s2
  $region1: #{tpu_custom_call.1} parent=0
    #allocation2 [shape = 'u8[8192]{0}', space=vmem, size = 0x2000, scoped, tag = 'input window, operand 0, single buffered']
    #allocation3 [shape = 's32[1]{0}', space=sflag, size = 0x4, scoped, tag = 'scoped memory for tpu_custom_call.1']
    #allocation4 [shape = 's32[1]{0}', space=sflag, size = 0x4, scoped, tag = 'scoped memory for tpu_custom_call.1']
    #allocation5 [shape = 'u8[8192]{0}', space=vmem, size = 0x2000, scoped, tag = 'output window, operand 0, single buffered']
    %6 = vsyncpa [#allocation3], 0
    %7 = vsyncpa [#allocation4], 0
    // Predicated region
    $region2: #{tpu_custom_call.1} parent=1 // pred_check
      _
    $region3: #{tpu_custom_call.1} parent=1 // pred_check_branch
      %9 = sbr.rel (0) target = $region5
    $region4: #{tpu_custom_call.1} parent=1 // pred_region
      %11 = vsyncadd [#allocation3], 0
      %s13 = sshll.u32 %s0, 4
      %s14 = int_to_ptr.hbm [resolvable:$true] %s13
      %s15 = sshll.u32 [#allocation2], 4
      %s16 = int_to_ptr.vmem [resolvable:$true] %s15
      %18 = dma.hbm_to_vmem [thread:$0]  %s14, 256, %s16, [#allocation3]
    $region5: #{tpu_custom_call.1} parent=1 // pred_fallthru
      _
    // Predicated region
    $region6: #{tpu_custom_call.1} parent=1 // pred_check
      _
    $region7: #{tpu_custom_call.1} parent=1 // pred_check_branch
      %20 = sbr.rel (0) target = $region9
    $region8: #{tpu_custom_call.1} parent=1 // pred_region
      %22 = dma.done [#allocation3], 256
    $region9: #{tpu_custom_call.1} parent=1 // pred_fallthru
      _
    %v23 = vld [vmem:[#allocation2] sm:$0xff]
    %v24 = vld [vmem:[#allocation2 + $0x8] sm:$0xff]
    %v25 = vmul.f32 %v23, 10.0
    %v26 = vmul.f32 %v24, 10.0
    %v27 = vsub.f32 %v25, 600.0
    %v28 = vsub.f32 %v26, 600.0
    %v29 = vmax.f32 %v27, 0.0
    %v30 = vmax.f32 %v28, 0.0
    %v31 = vadd.f32 %v25, 200.0
    %v32 = vadd.f32 %v26, 200.0
    %v33 = vmax.f32 %v31, 0.0
    %v34 = vmax.f32 %v32, 0.0
    %v35 = vsub.f32 %v29, %v33
    %v36 = vsub.f32 %v30, %v34
    %v37 = vadd.f32 %v35, 10.0
    %v38 = vadd.f32 %v36, 10.0
    %v39 = vmax.f32 %v37, 0.0
    %v40 = vmax.f32 %v38, 0.0
    %41 = vst [vmem:[#allocation5] sm:$0xff] %v39
    %42 = vst [vmem:[#allocation5 + $0x8] sm:$0xff] %v40
    // Predicated region
    $region10: #{tpu_custom_call.1} parent=1 // pred_check
      _
    $region11: #{tpu_custom_call.1} parent=1 // pred_check_branch
      %44 = sbr.rel (0) target = $region13
    $region12: #{tpu_custom_call.1} parent=1 // pred_region
      %46 = vsyncadd [#allocation4], 0
      %s48 = sshll.u32 [#allocation5], 4
      %s49 = int_to_ptr.vmem [resolvable:$true] %s48
      %s50 = sshll.u32 %s1, 4
      %s51 = int_to_ptr.hbm [resolvable:$true] %s50
      %53 = dma.vmem_to_hbm [thread:$0]  %s49, 256, %s51, [#allocation4]
    $region13: #{tpu_custom_call.1} parent=1 // pred_fallthru
      _
    // Predicated region
    $region14: #{tpu_custom_call.1} parent=1 // pred_check
      _
    $region15: #{tpu_custom_call.1} parent=1 // pred_check_branch
      %55 = sbr.rel (0) target = $region17
    $region16: #{tpu_custom_call.1} parent=1 // pred_region
      %57 = dma.done [#allocation4], 256
    $region17: #{tpu_custom_call.1} parent=1 // pred_fallthru
      _
    %58 = vsyncpa [#allocation3], 1
    %59 = vsyncpa [#allocation4], 1

</llo_original>
